<compile_context>
chip_gen: v6e
topology: v6e:2x2x1
jax: 0.10.0
libtpu: 0.0.40
codegen_flags: <defaults>
</compile_context>

<pallas_src>
import functools

import jax
import jax.numpy as jnp
from jax import lax
from jax.experimental import pallas as pl
from jax.experimental.pallas import tpu as pltpu


def _layernorm2d_kernel(x_ref, wb_ref, o_ref, *, eps: float, inv_c: float):
    # x_ref: (NB, C, T)   wb_ref: (C, 2) = [weight | bias]   o_ref: (NB, C, T)
    xf = x_ref[...].astype(jnp.float32)

    # Two-pass statistics over the VMEM-resident block (PyTorch parity).
    mean = jnp.sum(xf, axis=1, keepdims=True) * inv_c        # (NB, 1, T)
    d = xf - mean
    var = jnp.sum(d * d, axis=1, keepdims=True) * inv_c      # (NB, 1, T)

    # rsqrt on the small stats tensor (EUP slot); full-width mults on the VPU.
    inv = lax.rsqrt(var + eps)                               # (NB, 1, T)

    w = wb_ref[:, 0:1].astype(jnp.float32)[None, :, :]       # (1, C, 1)
    b = wb_ref[:, 1:2].astype(jnp.float32)[None, :, :]       # (1, C, 1)

    o_ref[...] = (d * inv * w + b).astype(o_ref.dtype)


def _vmem_budget_bytes():
    """(vmem_limit_bytes, physical_capacity) sized per TPU generation."""
    try:
        cap = int(pltpu.get_tpu_info().vmem_capacity_bytes)
    except Exception:
        cap = 64 * 1024 * 1024                               # conservative fallback
    if cap >= 128 * 1024 * 1024:                             # v5e / v6e
        return 96 * 1024 * 1024, cap
    return min(52 * 1024 * 1024, int(cap * 0.8)), cap        # v7x (64 MiB / TC)


def layernorm2d(x: jax.Array, weight: jax.Array, bias: jax.Array,
                eps: float = 1e-6) -> jax.Array:
    """LayerNorm over the channel dim of an NCHW tensor (PyTorch LayerNorm2d)."""
    N, C, H, W = x.shape
    HW = H * W
    x3 = x.reshape(N, C, HW)

    itemsize = jnp.dtype(x.dtype).itemsize
    # Resident VMEM per block element: double-buffered input + output blocks
    # (4 * itemsize) plus ~8 B of fp32 temporaries inside the kernel (xf, d).
    bytes_per_elem = 4 * itemsize + 8

    vmem_limit, vmem_cap = _vmem_budget_bytes()
    # Guard pathological C: a minimal (1, C, 128) block must fit the limit.
    min_block_bytes = bytes_per_elem * C * 128
    if min_block_bytes * 4 // 3 > vmem_limit:
        vmem_limit = min(vmem_cap * 15 // 16, min_block_bytes * 4 // 3)

    block_elems_max = max(C * 128, (vmem_limit * 3 // 4) // bytes_per_elem)

    # Spatial tile: as many 128-lane groups as the budget allows, capped at the
    # ceil-rounded spatial extent; the last block may be ragged (masked vst).
    lanes_needed = -(-HW // 128)
    max_lanes = max(1, block_elems_max // (C * 128))
    t_lanes = max(1, min(lanes_needed, max_lanes))
    T = t_lanes * 128
    num_t = -(-HW // T)

    # Fold batch elements only when one block already spans the full spatial
    # extent; keep >= 2 grid steps so both v7x TensorCores get work.
    NB = 1
    if num_t == 1 and N > 1:
        nb_cap = min(N // 2, max(1, block_elems_max // (C * T)))
        for nb in range(max(1, nb_cap), 0, -1):
            if N % nb == 0:
                NB = nb
                break
    grid = (N // NB, num_t)

    # Fuse weight and bias into a single (C, 2) constant block; C sits on
    # sublanes so the lane-broadcast inside the kernel is free.
    wb = jnp.stack([weight.astype(jnp.float32), bias.astype(jnp.float32)],
                   axis=-1)                                  # (C, 2)

    # TODO(synk): for C < 8 (fp32) / C < 16 (bf16) the sublane padding of the
    # (NB, C, T) block wastes bandwidth; a small-C repack is not implemented.

    out3 = pl.pallas_call(
        functools.partial(_layernorm2d_kernel, eps=float(eps), inv_c=1.0 / C),
        out_shape=jax.ShapeDtypeStruct((N, C, HW), x.dtype),
        grid_spec=pltpu.PrefetchScalarGridSpec(
            num_scalar_prefetch=0,
            grid=grid,
            in_specs=[
                pl.BlockSpec((NB, C, T), lambda n, t: (n, 0, t)),
                pl.BlockSpec((C, 2), lambda n, t: (0, 0)),
            ],
            out_specs=pl.BlockSpec((NB, C, T), lambda n, t: (n, 0, t)),
        ),
        compiler_params=pltpu.CompilerParams(
            dimension_semantics=("parallel", "parallel"),
            vmem_limit_bytes=int(vmem_limit)),
    )(x3, wb)

    return out3.reshape(N, C, H, W)


if __name__ == "__main__":
    key = jax.random.PRNGKey(0)
    N, C, H, W = 2, 4, 16, 16
    x = jax.random.normal(key, (N, C, H, W), dtype=jnp.float32)

    # Deterministic parameter init, matching nn.Parameter(torch.ones/zeros).
    weight = jnp.ones((C,), dtype=jnp.float32)
    bias = jnp.zeros((C,), dtype=jnp.float32)
    eps = 1e-6

    out = layernorm2d(x, weight, bias, eps)
    out = jax.block_until_ready(out)

    # Pure-JAX reference (two-pass, divide form) for a sanity check.
    u = jnp.mean(x, axis=1, keepdims=True)
    s = jnp.mean((x - u) ** 2, axis=1, keepdims=True)
    ref = (x - u) / jnp.sqrt(s + eps)
    ref = weight[None, :, None, None] * ref + bias[None, :, None, None]

    assert out.shape == (N, C, H, W)
    assert jnp.allclose(out, ref, atol=1e-5, rtol=1e-5)
    print("KERNEL_OK")
</pallas_src>

<mosaic_0001>
module attributes {stable_mosaic.version = 11 : i64} {
  func.func @_layernorm2d_kernel(%arg0: i32, %arg1: i32, %arg2: memref<1x4x256xf32, #tpu.memory_space<vmem>>, %arg3: memref<4x2xf32, #tpu.memory_space<vmem>>, %arg4: memref<1x4x256xf32, #tpu.memory_space<vmem>>) attributes {dimension_semantics = [#tpu.dimension_semantics<parallel>, #tpu.dimension_semantics<parallel>], iteration_bounds = array<i64: 2, 1>, scalar_prefetch = 0 : i64, scratch_operands = 0 : i64, tpu.core_type = #tpu.core_type<tc>, window_params = [{transform_indices = @transform_0, window_bounds = array<i64: 1, 4, 256>}, {pipeline_mode = #tpu.pipeline_mode<synchronous>, transform_indices = @transform_1, window_bounds = array<i64: 4, 2>}, {transform_indices = @transform_2, window_bounds = array<i64: 1, 4, 256>}]} {
    %c0 = arith.constant 0 : index
    %c0_0 = arith.constant 0 : index
    %c0_1 = arith.constant 0 : index
    %0 = vector.load %arg2[%c0, %c0_0, %c0_1] : memref<1x4x256xf32, #tpu.memory_space<vmem>>, vector<1x4x256xf32>
    %cst = arith.constant dense<0.000000e+00> : vector<1x256xf32>
    %1 = vector.multi_reduction <add>, %0, %cst [1] : vector<1x4x256xf32> to vector<1x256xf32>
    %2 = vector.shape_cast %1 : vector<1x256xf32> to vector<1x1x256xf32>
    %cst_2 = arith.constant 2.500000e-01 : f32
    %3 = vector.broadcast %cst_2 : f32 to vector<1x1x256xf32>
    %4 = arith.mulf %2, %3 : vector<1x1x256xf32>
    %5 = vector.broadcast %4 : vector<1x1x256xf32> to vector<1x4x256xf32>
    %6 = arith.subf %0, %5 : vector<1x4x256xf32>
    %7 = arith.mulf %6, %6 : vector<1x4x256xf32>
    %cst_3 = arith.constant dense<0.000000e+00> : vector<1x256xf32>
    %8 = vector.multi_reduction <add>, %7, %cst_3 [1] : vector<1x4x256xf32> to vector<1x256xf32>
    %9 = vector.shape_cast %8 : vector<1x256xf32> to vector<1x1x256xf32>
    %cst_4 = arith.constant 2.500000e-01 : f32
    %10 = vector.broadcast %cst_4 : f32 to vector<1x1x256xf32>
    %11 = arith.mulf %9, %10 : vector<1x1x256xf32>
    %cst_5 = arith.constant 9.99999997E-7 : f32
    %12 = vector.broadcast %cst_5 : f32 to vector<1x1x256xf32>
    %13 = arith.addf %11, %12 : vector<1x1x256xf32>
    %14 = math.rsqrt %13 : vector<1x1x256xf32>
    %c0_6 = arith.constant 0 : index
    %c0_7 = arith.constant 0 : index
    %15 = vector.load %arg3[%c0_6, %c0_7] : memref<4x2xf32, #tpu.memory_space<vmem>>, vector<4x1xf32>
    %16 = vector.shape_cast %15 : vector<4x1xf32> to vector<1x4x1xf32>
    %c0_8 = arith.constant 0 : index
    %c1 = arith.constant 1 : index
    %17 = vector.load %arg3[%c0_8, %c1] : memref<4x2xf32, #tpu.memory_space<vmem>>, vector<4x1xf32>
    %18 = vector.shape_cast %17 : vector<4x1xf32> to vector<1x4x1xf32>
    %19 = vector.broadcast %14 : vector<1x1x256xf32> to vector<1x4x256xf32>
    %20 = arith.mulf %6, %19 : vector<1x4x256xf32>
    %21 = vector.broadcast %16 : vector<1x4x1xf32> to vector<1x4x256xf32>
    %22 = arith.mulf %20, %21 : vector<1x4x256xf32>
    %23 = vector.broadcast %18 : vector<1x4x1xf32> to vector<1x4x256xf32>
    %24 = arith.addf %22, %23 : vector<1x4x256xf32>
    %c0_9 = arith.constant 0 : index
    %c0_10 = arith.constant 0 : index
    %c0_11 = arith.constant 0 : index
    %25 = vector.load %arg4[%c0_9, %c0_10, %c0_11] : memref<1x4x256xf32, #tpu.memory_space<vmem>>, vector<1x4x256xf32>
    tpu.vector_store %arg4[%c0_9, %c0_10, %c0_11], %24 {strides = array<i32>} : memref<1x4x256xf32, #tpu.memory_space<vmem>>, vector<1x4x256xf32>,
    return
  }
  func.func @transform_0(%arg0: i32, %arg1: i32) -> (i32, i32, i32) {
    %c0_i32 = arith.constant 0 : i32
    %c0_i32_0 = arith.constant 0 : i32
    return %arg0, %c0_i32, %arg1 : i32, i32, i32
  }
  func.func @transform_1(%arg0: i32, %arg1: i32) -> (i32, i32) {
    %c0_i32 = arith.constant 0 : i32
    %c0_i32_0 = arith.constant 0 : i32
    %c0_i32_1 = arith.constant 0 : i32
    return %c0_i32, %c0_i32_0 : i32, i32
  }
  func.func @transform_2(%arg0: i32, %arg1: i32) -> (i32, i32, i32) {
    %c0_i32 = arith.constant 0 : i32
    %c0_i32_0 = arith.constant 0 : i32
    return %arg0, %c0_i32, %arg1 : i32, i32, i32
  }
}

</mosaic_0001>

<llo_original>
// kernel: tpu_custom_call.1
$region0: #{tpu_custom_call.1}
  #allocation0 [shape = 'u32[]', space=smem, size = 0x4, offset = 0x4, fixed_abs, tag = 'smem constant byte address 0x4 - core index']
  #allocation1 [shape = 'u32[144,128]{1,0:T(1,128)}', space=vmem, size = 0x12000, scoped, tag = 'internal scratch']
  %s0 = inlined_call_operand.hbm [shape: f32[2,4,256], index: 0, kind: input, shape index: {}]
  %s1 = inlined_call_operand.vmem [shape: f32[4,2], index: 1, kind: input, shape index: {}]
  %s2 = inlined_call_operand.hbm [shape: f32[2,4,256], index: 2, kind: output, shape index: {}]
  %s3 = sld [smem:[#allocation0]]
  $region45: #{tpu_custom_call.1} parent=0
    _
  %s5 = ssub.s32 1, %s3
  %s6 = scalar_select 0, %s5, %s3
  $region1: #{tpu_custom_call.1} parent=0
    #allocation2 [shape = 'u8[8192]{0}', space=vmem, size = 0x2000, scoped, tag = 'input window, operand 0']
    #allocation3 [shape = 's32[2]{0}', space=sflag, size = 0x8, scoped, tag = 'scoped memory for tpu_custom_call.1']
    #allocation4 [shape = 's32[2]{0}', space=sflag, size = 0x8, scoped, tag = 'scoped memory for tpu_custom_call.1']
    #allocation5 [shape = 'u8[8192]{0}', space=vmem, size = 0x2000, scoped, tag = 'output window, operand 0']
    %7 = vsyncpa [#allocation3], 0
    %s8 = scalar_lea.sflag [#allocation3], 1
    %9 = vsyncpa %s8, 0
    %10 = vsyncpa [#allocation4], 0
    %s11 = scalar_lea.sflag [#allocation4], 1
    %12 = vsyncpa %s11, 0
    loop: start=0, step=1, limit=4
    $region2: #{tpu_custom_call.1} parent=1 // loop_pre_header
      _
    $region3: #{tpu_custom_call.1} parent=1 // loop_header
      %s14 = sphi 0, %s18
      %p15 = scmp.ge.s32.totalorder %s14, 4
      %s21 = sphi 0, %s33
      %s22 = sphi 0, %s29
      %s23 = sphi 0, %s21
      %s24 = sphi 0, %s22
      %s25 = sphi 0, %s23
      %s26 = sphi 0, %s24
      %s38 = sphi 0, %s40
      %s41 = sphi 0, %s38
      %s42 = sphi 0, %s41
      %s58 = sphi 0, %s42
      %s62 = sphi 0, %s62
      %s64 = sphi 0, %s62
      %s65 = sphi 0, %s64
      %s79 = sphi 0, %s65
      %s87 = sphi 0, %s89
      %s90 = sphi 0, %s87
      %s91 = sphi 0, %s90
      %s107 = sphi 0, %s91
    $region4: #{tpu_custom_call.1} parent=1 // loop_header_branch
      %17 = sbr.rel (%p15) target = $region8
    $region5: #{tpu_custom_call.1} parent=1 // loop_body
      %s19 = ssub.s32 %s14, 1
      %s20 = ssub.s32 %s14, 2
      %s27 = sadd.s32 1, %s22
      %p28 = scmp.ge.s32.totalorder %s27, 1
      %s29 = scalar_select %p28, 0, %s27
      %s30 = sadd.s32 1, %s21
      %s31 = scalar_select %p28, %s30, %s21
      %p32 = scmp.ge.s32.totalorder %s31, 2
      %s33 = scalar_select %p32, 0, %s31
      %s34 = ssub.s32 %s21, %s33
      %s35 = ssub.s32 %s22, %s29
      %s36 = sor.u32 %s34, %s35
      %p37 = scmp.eq.s32.totalorder %s36, 0
      %s39 = sadd.s32 %s38, 1
      %s40 = scalar_select %p37, %s38, %s39
      %p43 = pneg %p37
      %p44 = scmp.eq.s32.totalorder %s14, 1
      %p45 = por %p43, %p44
      %p46 = scmp.ne.s32.totalorder %s38, %s41
      %p47 = scmp.eq.s32.totalorder %s14, 0
      %p48 = por %p46, %p47
      %p49 = scmp.ne.s32.totalorder %s38, %s41
      %p50 = scmp.eq.s32.totalorder %s19, 1
      %p51 = por %p49, %p50
      %p52 = scmp.ne.s32.totalorder %s41, %s42
      %p53 = scmp.eq.s32.totalorder %s19, 0
      %p54 = por %p52, %p53
      %p55 = scmp.ne.s32.totalorder %s41, %s42
      %p56 = scmp.eq.s32.totalorder %s20, 1
      %p57 = por %p55, %p56
      %p59 = scmp.ne.s32.totalorder %s42, %s58
      %p60 = scmp.eq.s32.totalorder %s20, 0
      %p61 = por %p59, %p60
      %s63 = sadd.s32 %s62, 1
      %p66 = scmp.eq.s32.totalorder %s14, 1
      %p67 = scmp.ne.s32.totalorder %s62, %s64
      %p68 = scmp.eq.s32.totalorder %s14, 0
      %p69 = por %p67, %p68
      %p70 = scmp.ne.s32.totalorder %s62, %s64
      %p71 = scmp.eq.s32.totalorder %s19, 1
      %p72 = por %p70, %p71
      %p73 = scmp.ne.s32.totalorder %s64, %s65
      %p74 = scmp.eq.s32.totalorder %s19, 0
      %p75 = por %p73, %p74
      %p76 = scmp.ne.s32.totalorder %s64, %s65
      %p77 = scmp.eq.s32.totalorder %s20, 1
      %p78 = por %p76, %p77
      %p80 = scmp.ne.s32.totalorder %s65, %s79
      %p81 = scmp.eq.s32.totalorder %s20, 0
      %p82 = por %p80, %p81
      %s83 = ssub.s32 %s21, %s33
      %s84 = ssub.s32 %s22, %s29
      %s85 = sor.u32 %s83, %s84
      %p86 = scmp.eq.s32.totalorder %s85, 0
      %s88 = sadd.s32 %s87, 1
      %s89 = scalar_select %p86, %s87, %s88
      %p92 = pneg %p86
      %p93 = scmp.eq.s32.totalorder %s14, 1
      %p94 = por %p92, %p93
      %p95 = scmp.ne.s32.totalorder %s87, %s90
      %p96 = scmp.eq.s32.totalorder %s14, 0
      %p97 = por %p95, %p96
      %p98 = scmp.ne.s32.totalorder %s87, %s90
      %p99 = scmp.eq.s32.totalorder %s19, 1
      %p100 = por %p98, %p99
      %p101 = scmp.ne.s32.totalorder %s90, %s91
      %p102 = scmp.eq.s32.totalorder %s19, 0
      %p103 = por %p101, %p102
      %p104 = scmp.ne.s32.totalorder %s90, %s91
      %p105 = scmp.eq.s32.totalorder %s20, 1
      %p106 = por %p104, %p105
      %p108 = scmp.ne.s32.totalorder %s91, %s107
      %p109 = scmp.eq.s32.totalorder %s20, 0
      %p110 = por %p108, %p109
      %p111 = scmp.le.s32.totalorder 1, %s14
      %p112 = scmp.lt.s32.totalorder %s14, 3
      %p113 = pnand %p111, %p112
      %p114 = pneg %p113
      // Predicated region
      $region9: #{tpu_custom_call.1} parent=5 // pred_check
        _
      $region10: #{tpu_custom_call.1} parent=5 // pred_check_branch
        %116 = sbr.rel (%p113) target = $region12
      $region11: #{tpu_custom_call.1} parent=5 // pred_region
        %s117 = ssub.s32 %s14, 1
        // Predicated region
        $region13: #{tpu_custom_call.1} parent=11 // pred_check
          %p118 = pneg %p75
        $region14: #{tpu_custom_call.1} parent=11 // pred_check_branch
          %120 = sbr.rel (%p118) target = $region16
        $region15: #{tpu_custom_call.1} parent=11 // pred_region
          _
        $region16: #{tpu_custom_call.1} parent=11 // pred_fallthru
          _
      $region12: #{tpu_custom_call.1} parent=5 // pred_fallthru
        _
      %p121 = scmp.lt.s32.totalorder %s14, 2
      // Predicated region
      $region17: #{tpu_custom_call.1} parent=5 // pred_check
        %p122 = pneg %p121
      $region18: #{tpu_custom_call.1} parent=5 // pred_check_branch
        %124 = sbr.rel (%p122) target = $region20
      $region19: #{tpu_custom_call.1} parent=5 // pred_region
        // Predicated region
        $region21: #{tpu_custom_call.1} parent=19 // pred_check
          %p125 = pneg %p48
        $region22: #{tpu_custom_call.1} parent=19 // pred_check_branch
          %127 = sbr.rel (%p125) target = $region24
        $region23: #{tpu_custom_call.1} parent=19 // pred_region
          %s128 = sand.u32 %s38, 1
          %s129 = scalar_lea.sflag [#allocation3], %s128
          %s130 = sand.u32 %s38, 1
          %s131 = smul.addr %s130, 8
          %s132 = scalar_lea.vmem [#allocation2], %s131
          %s133 = smul.u32 2, %s22
          %s135 = ssub.s32 128, 128
          %136 = vsyncadd %s129, %s135
          %s137 = smul.addr %s21, 2
          %s138 = sadd.s32 %s133, %s137
          %s139 = smul.addr %s138, 64
          %s140 = scalar_lea.hbm %s0, %s139
          %s142 = sshll.u32 %s132, 4
          %s143 = int_to_ptr.vmem [resolvable:$true] %s142
          %145 = dma.hbm_to_vmem [thread:$0]  %s140, 128, %s143, %s129
        $region24: #{tpu_custom_call.1} parent=19 // pred_fallthru
          _
      $region20: #{tpu_custom_call.1} parent=5 // pred_fallthru
        _
      %p146 = scmp.le.s32.totalorder 1, %s14
      %p147 = scmp.lt.s32.totalorder %s14, 3
      %p148 = pnand %p146, %p147
      %p149 = pneg %p148
      // Predicated region
      $region25: #{tpu_custom_call.1} parent=5 // pred_check
        _
      $region26: #{tpu_custom_call.1} parent=5 // pred_check_branch
        %151 = sbr.rel (%p148) target = $region28
      $region27: #{tpu_custom_call.1} parent=5 // pred_region
        %s152 = ssub.s32 %s14, 1
        %s153 = sand.u32 %s41, 1
        %s154 = scalar_lea.sflag [#allocation3], %s153
        %s155 = sand.u32 %s41, 1
        %s156 = smul.addr %s155, 8
        %s157 = scalar_lea.vmem [#allocation2], %s156
        // Predicated region
        $region29: #{tpu_custom_call.1} parent=27 // pred_check
          %p158 = pneg %p54
        $region30: #{tpu_custom_call.1} parent=27 // pred_check_branch
          %160 = sbr.rel (%p158) target = $region32
        $region31: #{tpu_custom_call.1} parent=27 // pred_region
          %161 = dma.done %s154, 128
        $region32: #{tpu_custom_call.1} parent=27 // pred_fallthru
          _
        %s162 = sand.u32 %s41, 1
        %s163 = scalar_lea.sflag [#allocation3], %s162
        %s164 = sand.u32 %s41, 1
        %s165 = smul.addr %s164, 8
        %s166 = scalar_lea.vmem [#allocation2], %s165
        %p167 = pneg %p54
        %p168 = pneg %p51
        %p169 = pneg %p75
        %p170 = pneg %p72
        %p171 = pneg %p103
        %p172 = pneg %p100
        %s173 = sand.u32 %s90, 1
        %s174 = scalar_lea.sflag [#allocation4], %s173
        %s175 = sand.u32 %s90, 1
        %s176 = smul.addr %s175, 8
        %s177 = scalar_lea.vmem [#allocation5], %s176
        %s178 = smul.u32 2, %s24
        %s179 = smul.u32 2, %s24
        %v180 = vld [vmem:[%s157] sm:$0xff]
        %v182 = vcombine.high %v180, %v180
        %vm184 = vcmask 1043456
        %v185 = vsel %vm184, %v180, 0.0
        %v186 = vrot.slane %v185, 4
        %v187 = vadd.f32 %v185, %v186
        %v188 = vrot.slane %v187, 2
        %v189 = vadd.f32 %v187, %v188
        %v190 = vrot.slane %v189, 1
        %v191 = vadd.f32 %v189, %v190
        %v192 = vsel %vm184, %v182, 0.0
        %v193 = vrot.slane %v192, 4
        %v194 = vadd.f32 %v192, %v193
        %v195 = vrot.slane %v194, 2
        %v196 = vadd.f32 %v194, %v195
        %v197 = vrot.slane %v196, 1
        %v198 = vadd.f32 %v196, %v197
        %v199 = vmul.f32 %v191, 0.25
        %v200 = vmul.f32 %v198, 0.25
        %v203 = vcombine.low %v199, %v200
        %v205 = vsub.f32 %v180, %v203
        %v206 = vmul.f32 %v205, %v205
        %v208 = vcombine.high %v206, %v206
        %v210 = vsel %vm184, %v206, 0.0
        %v211 = vrot.slane %v210, 4
        %v212 = vadd.f32 %v210, %v211
        %v213 = vrot.slane %v212, 2
        %v214 = vadd.f32 %v212, %v213
        %v215 = vrot.slane %v214, 1
        %v216 = vadd.f32 %v214, %v215
        %v217 = vsel %vm184, %v208, 0.0
        %v218 = vrot.slane %v217, 4
        %v219 = vadd.f32 %v217, %v218
        %v220 = vrot.slane %v219, 2
        %v221 = vadd.f32 %v219, %v220
        %v222 = vrot.slane %v221, 1
        %v223 = vadd.f32 %v221, %v222
        %v224 = vmul.f32 %v216, 0.25
        %v225 = vmul.f32 %v223, 0.25
        %v226 = vadd.f32 %v224, 1e-06
        %v227 = vadd.f32 %v225, 1e-06
        %v228 = vrsqrt.pop %v226
        %v229 = vrsqrt.pop %v227
        %v230 = vld [vmem:[%s1] sm:$0xf]
        %v233 = vcombine.low %v228, %v229
        %v235 = vmul.f32 %v205, %v233
        %237 = vset.pattern.permute.xlu0 0
        %238 = vperm.xlu0 %237, %v230
        %v239 = vpop.permute.xlu0 %238
        %v241 = vunpack.c.l.s4 839922192
        %v242 = vunpack.c.0.s8 %v241
        %v243 = vlaneseq
        %v244 = vshrl.u32 %v243, 7
        %v245 = vsub.s32 %v242, %v244
        %v246 = vrot.slane %v239, %v245
        %v248 = vmul.f32 %v235, %v246
        %249 = vset.pattern.permute.xlu0 1
        %250 = vperm.xlu0 %249, %v230
        %v251 = vpop.permute.xlu0 %250
        %v253 = vunpack.c.l.s4 839922192
        %v254 = vunpack.c.0.s8 %v253
        %v255 = vlaneseq
        %v256 = vshrl.u32 %v255, 7
        %v257 = vsub.s32 %v254, %v256
        %v258 = vrot.slane %v251, %v257
        %v260 = vadd.f32 %v248, %v258
        %261 = vst [vmem:[%s177] sm:$0xff] %v260
        %s262 = sand.u32 %s90, 1
        %s263 = scalar_lea.sflag [#allocation4], %s262
        %s264 = sand.u32 %s90, 1
        %s265 = smul.addr %s264, 8
        %s266 = scalar_lea.vmem [#allocation5], %s265
        // Predicated region
        $region33: #{tpu_custom_call.1} parent=27 // pred_check
          %p267 = pneg %p100
        $region34: #{tpu_custom_call.1} parent=27 // pred_check_branch
          %269 = sbr.rel (%p267) target = $region36
        $region35: #{tpu_custom_call.1} parent=27 // pred_region
          %s270 = smul.u32 2, %s24
          %s272 = ssub.s32 128, 128
          %273 = vsyncadd %s263, %s272
          %s274 = smul.addr %s23, 2
          %s275 = sadd.s32 %s270, %s274
          %s276 = smul.addr %s275, 64
          %s277 = scalar_lea.hbm %s2, %s276
          %s279 = sshll.u32 %s266, 4
          %s280 = int_to_ptr.vmem [resolvable:$true] %s279
          %282 = dma.vmem_to_hbm [thread:$0]  %s280, 128, %s277, %s263
        $region36: #{tpu_custom_call.1} parent=27 // pred_fallthru
          _
      $region28: #{tpu_custom_call.1} parent=5 // pred_fallthru
        _
      %p283 = scmp.le.s32.totalorder 2, %s14
      // Predicated region
      $region37: #{tpu_custom_call.1} parent=5 // pred_check
        %p284 = pneg %p283
      $region38: #{tpu_custom_call.1} parent=5 // pred_check_branch
        %286 = sbr.rel (%p284) target = $region40
      $region39: #{tpu_custom_call.1} parent=5 // pred_region
        %s287 = ssub.s32 %s14, 2
        // Predicated region
        $region41: #{tpu_custom_call.1} parent=39 // pred_check
          %p288 = pneg %p106
        $region42: #{tpu_custom_call.1} parent=39 // pred_check_branch
          %290 = sbr.rel (%p288) target = $region44
        $region43: #{tpu_custom_call.1} parent=39 // pred_region
          %s291 = sand.u32 %s91, 1
          %s292 = scalar_lea.sflag [#allocation4], %s291
          %s293 = sand.u32 %s91, 1
          %s294 = smul.addr %s293, 8
          %s295 = scalar_lea.vmem [#allocation5], %s294
          %296 = dma.done %s292, 128
        $region44: #{tpu_custom_call.1} parent=39 // pred_fallthru
          _
      $region40: #{tpu_custom_call.1} parent=5 // pred_fallthru
        _
    $region6: #{tpu_custom_call.1} parent=1 // loop_footer
      %s18 = sadd.s32 1, %s14
    $region7: #{tpu_custom_call.1} parent=1 // loop_footer_branch
      %13 = sbr.rel target = $region3
    $region8: #{tpu_custom_call.1} parent=1 // loop_exit
      _
    %297 = vsyncpa [#allocation3], 1
    %s298 = scalar_lea.sflag [#allocation3], 1
    %299 = vsyncpa %s298, 1
    %300 = vsyncpa [#allocation4], 1
    %s301 = scalar_lea.sflag [#allocation4], 1
    %302 = vsyncpa %s301, 1

</llo_original>
